<compile_context>
chip_gen: v7x
topology: tpu7x:2x2x1
jax: 0.10.0
libtpu: 0.0.40
codegen_flags: <defaults>
</compile_context>

<pallas_src>
import jax
import jax.numpy as jnp
from jax import lax
from jax.experimental import pallas as pl
from jax.experimental.pallas import tpu as pltpu


LANE = 128
_WORKING_SET_BUDGET = 24 * 1024 * 1024   # per-step double-buffered tile budget
_VMEM_LIMIT_BYTES = 48 * 1024 * 1024     # scoped VMEM limit (safe on v5e/v6e/v7x)
_MAX_L_TILE = 8192                        # lane-tile cap
_MAX_BN = 8                               # max batch elements per grid step


def _round_up(x, m):
    return (x + m - 1) // m * m


def _largest_dividing_tile(lp, max_tile):
    """Largest multiple of 128 dividing lp (a multiple of 128) and <= max_tile."""
    n = lp // LANE
    best = 1
    d = 1
    while d * d <= n:
        if n % d == 0:
            for c in (d, n // d):
                if c * LANE <= max_tile and c > best:
                    best = c
        d += 1
    return best * LANE


def _choose_tiles(N, ni, nf, L):
    """Pick (Bn, TL, L_padded) from the VMEM working-set budget."""
    per_lane_bytes = 2 * (ni + 2 * nf) * 4          # x + res + out, double-buffered
    budget_tl = max(LANE, (_WORKING_SET_BUDGET // per_lane_bytes) // LANE * LANE)
    budget_tl = min(budget_tl, _MAX_L_TILE)
    lp128 = _round_up(L, LANE)
    if lp128 <= budget_tl:
        tl = lp128                                   # one lane-aligned tile covers L
    else:
        tl = _largest_dividing_tile(lp128, budget_tl)
    lp = _round_up(L, tl)
    bn = 1
    for cand in range(min(N, _MAX_BN), 0, -1):       # batch-block when L is short
        if N % cand == 0 and cand * per_lane_bytes * tl <= _WORKING_SET_BUDGET:
            bn = cand
            break
    return bn, tl, lp


# ----------------------------------------------------------------------------
# Pass 1: per-batch-block partials of sum(x) and the Gram matrix x @ x^T.
# The L reduction rides on the MXU; batch axis is megacore-parallel.
# ----------------------------------------------------------------------------
def _bn_stats_kernel(x_ref, sx_ref, gram_ref):
    # x_ref: (Bn, ni, TL)   sx_ref: (ni, 1)   gram_ref: (ni, ni)
    @pl.when(pl.program_id(1) == 0)
    def _init():
        sx_ref[...] = jnp.zeros_like(sx_ref)
        gram_ref[...] = jnp.zeros_like(gram_ref)

    bn_, ni = x_ref.shape[0], x_ref.shape[1]
    sx = jnp.zeros((ni, 1), jnp.float32)
    g = jnp.zeros((ni, ni), jnp.float32)
    for b in range(bn_):                              # small static unroll
        xb = x_ref[b]                                 # (ni, TL)
        sx = sx + jnp.sum(xb, axis=-1, keepdims=True)
        g = g + lax.dot_general(                      # xb @ xb.T, contract over L
            xb, xb, (((1,), (1,)), ((), ())),
            preferred_element_type=jnp.float32)
    sx_ref[...] += sx
    gram_ref[...] += g


# ----------------------------------------------------------------------------
# Pass 2: o = ReLU(res + W_scaled @ x + shift)   (conv + folded BN + add + ReLU)
# ----------------------------------------------------------------------------
def _apply_kernel(x_ref, res_ref, w_ref, shift_ref, o_ref):
    # x_ref: (Bn, ni, TL)  res_ref/o_ref: (Bn, nf, TL)
    # w_ref: (nf, ni) BN-scale-folded weight   shift_ref: (nf, 1)
    w = w_ref[...]
    shift = shift_ref[...]                            # (nf, 1) broadcasts over lanes
    for b in range(x_ref.shape[0]):
        y = jnp.dot(w, x_ref[b], preferred_element_type=jnp.float32)   # (nf, TL)
        o_ref[b] = jnp.maximum(res_ref[b] + y + shift, 0.0)


def shortcut1d_forward(inp, res, w, gamma, beta, eps=1e-5):
    """Shortcut1d forward.

    inp:   (N, ni, L) float32  -- PyTorch NCL layout (no wrapper transposes)
    res:   (N, nf, L) float32  -- the `out` tensor added to the BN'd conv
    w:     (nf, ni)   float32  -- 1x1 Conv1d weight (PyTorch (nf, ni, 1) squeezed)
    gamma, beta: (nf,) float32 -- BatchNorm affine parameters
    returns (N, nf, L) float32
    """
    # TODO(synk): BatchNorm running_mean/var buffer updates (training-time state
    # mutation of the nn.Module) are not emitted; only the forward output is.
    N, ni, L = inp.shape
    nf = w.shape[0]
    bn_, tl, lp = _choose_tiles(N, ni, nf, L)
    nb = N // bn_
    nlt = lp // tl

    if lp != L:
        pad = lp - L
        inp_p = jnp.pad(inp, ((0, 0), (0, 0), (0, pad)))   # zero lanes: 0 stats
        res_p = jnp.pad(res, ((0, 0), (0, 0), (0, pad)))
    else:
        inp_p, res_p = inp, res

    # ---- pass 1: batch statistics of x (folded into conv-output stats below) ----
    sx_p, gram_p = pl.pallas_call(
        _bn_stats_kernel,
        out_shape=(jax.ShapeDtypeStruct((nb, ni, 1), jnp.float32),
                   jax.ShapeDtypeStruct((nb, ni, ni), jnp.float32)),
        grid=(nb, nlt),
        in_specs=[pl.BlockSpec((bn_, ni, tl), lambda n, lt: (n, 0, lt))],
        out_specs=(pl.BlockSpec((None, ni, 1), lambda n, lt: (n, 0, 0)),
                   pl.BlockSpec((None, ni, ni), lambda n, lt: (n, 0, 0))),
        compiler_params=pltpu.CompilerParams(
            dimension_semantics=("parallel", "arbitrary"),
            vmem_limit_bytes=_VMEM_LIMIT_BYTES),
    )(inp_p)

    # Tiny JAX glue: fold x stats -> conv-output BN affine (scale folded into W).
    sx = jnp.sum(sx_p, axis=0)                                   # (ni, 1)
    gram = jnp.sum(gram_p, axis=0)                               # (ni, ni)
    count = jnp.float32(N * L)
    mean = jnp.dot(w, sx, precision=lax.Precision.HIGHEST) / count        # (nf, 1)
    wg = jnp.dot(w, gram, precision=lax.Precision.HIGHEST)                # (nf, ni)
    ey2 = jnp.sum(wg * w, axis=1, keepdims=True) / count                  # (nf, 1)
    var = jnp.maximum(ey2 - mean * mean, 0.0)                    # biased batch var
    scale = gamma.reshape(nf, 1) * lax.rsqrt(var + eps)
    shift = beta.reshape(nf, 1) - mean * scale
    w_scaled = scale * w                                         # fold BN scale

    # ---- pass 2: conv + folded BN + residual add + ReLU, lane-dense write ----
    out_p = pl.pallas_call(
        _apply_kernel,
        out_shape=jax.ShapeDtypeStruct((N, nf, lp), jnp.float32),
        grid=(nb, nlt),
        in_specs=[
            pl.BlockSpec((bn_, ni, tl), lambda n, lt: (n, 0, lt)),
            pl.BlockSpec((bn_, nf, tl), lambda n, lt: (n, 0, lt)),
            pl.BlockSpec((nf, ni), lambda n, lt: (0, 0)),
            pl.BlockSpec((nf, 1), lambda n, lt: (0, 0)),
        ],
        out_specs=pl.BlockSpec((bn_, nf, tl), lambda n, lt: (n, 0, lt)),
        compiler_params=pltpu.CompilerParams(
            dimension_semantics=("parallel", "parallel"),
            vmem_limit_bytes=_VMEM_LIMIT_BYTES),
    )(inp_p, res_p, w_scaled, shift)

    return out_p[:, :, :L] if lp != L else out_p


# ----------------------------------------------------------------------------
# Pure-JAX reference (PyTorch semantics) for the correctness check.
# ----------------------------------------------------------------------------
def reference_forward(inp, res, w, gamma, beta, eps=1e-5):
    y = jnp.einsum("fi,nil->nfl", w, inp, precision=lax.Precision.HIGHEST)
    mean = jnp.mean(y, axis=(0, 2), keepdims=True)
    var = jnp.mean((y - mean) ** 2, axis=(0, 2), keepdims=True)   # biased
    yn = (y - mean) / jnp.sqrt(var + eps)
    yn = yn * gamma.reshape(1, -1, 1) + beta.reshape(1, -1, 1)
    return jnp.maximum(res + yn, 0.0)


def _run_case(key, N, ni, nf, L):
    k1, k2, k3, k4, k5 = jax.random.split(key, 5)
    inp = jax.random.normal(k1, (N, ni, L), jnp.float32)
    res = jax.random.normal(k2, (N, nf, L), jnp.float32)
    bound = 1.0 / (ni ** 0.5)                       # PyTorch Conv1d default init
    w = jax.random.uniform(k3, (nf, ni), jnp.float32, -bound, bound)
    gamma = jax.random.uniform(k4, (nf,), jnp.float32, 0.5, 1.5)
    beta = 0.1 * jax.random.normal(k5, (nf,), jnp.float32)

    out = jax.block_until_ready(shortcut1d_forward(inp, res, w, gamma, beta))
    assert out.shape == (N, nf, L), out.shape
    ref = jax.block_until_ready(reference_forward(inp, res, w, gamma, beta))
    err = float(jnp.max(jnp.abs(out - ref)))
    assert bool(jnp.allclose(out, ref, rtol=1e-2, atol=5e-2)), err


if __name__ == "__main__":
    key = jax.random.PRNGKey(0)
    k_a, k_b = jax.random.split(key, 2)
    # Small shapes consistent with the module: inp is (N, ni, L), out is (N, nf, L).
    _run_case(k_a, N=2, ni=8, nf=16, L=256)     # lane-aligned L, batch-blocked step
    _run_case(k_b, N=4, ni=8, nf=16, L=200)     # odd L -> zero-pad + slice path
    print("KERNEL_OK")
</pallas_src>

<mosaic_0001>
module attributes {stable_mosaic.version = 11 : i64} {
  func.func @_bn_stats_kernel(%arg0: i32, %arg1: i32, %arg2: memref<2x8x256xf32, #tpu.memory_space<vmem>>, %arg3: memref<1x8x1xf32, #tpu.memory_space<vmem>>, %arg4: memref<1x8x8xf32, #tpu.memory_space<vmem>>) attributes {dimension_semantics = [#tpu.dimension_semantics<parallel>, #tpu.dimension_semantics<arbitrary>], iteration_bounds = array<i64: 1, 1>, scalar_prefetch = 0 : i64, scratch_operands = 0 : i64, tpu.core_type = #tpu.core_type<tc>, window_params = [{transform_indices = @transform_0, window_bounds = array<i64: 2, 8, 256>}, {transform_indices = @transform_1, window_bounds = array<i64: 1, 8, 1>}, {transform_indices = @transform_2, window_bounds = array<i64: 1, 8, 8>}]} {
    %c0_i32 = arith.constant 0 : i32
    %0 = arith.cmpi eq, %arg1, %c0_i32 : i32
    %1 = arith.extui %0 : i1 to i32
    %c0_i32_0 = arith.constant 0 : i32
    %2 = arith.cmpi ne, %1, %c0_i32_0 : i32
    scf.if %2 {
      %cst_22 = arith.constant 0.000000e+00 : f32
      %31 = vector.broadcast %cst_22 : f32 to vector<8x1xf32>
      %c0_23 = arith.constant 0 : index
      %c0_24 = arith.constant 0 : index
      %c0_25 = arith.constant 0 : index
      %32 = vector.load %arg3[%c0_23, %c0_24, %c0_25] : memref<1x8x1xf32, #tpu.memory_space<vmem>>, vector<1x8x1xf32>
      %33 = vector.shape_cast %32 : vector<1x8x1xf32> to vector<8x1xf32>
      %34 = vector.shape_cast %31 : vector<8x1xf32> to vector<1x8x1xf32>
      tpu.vector_store %arg3[%c0_23, %c0_24, %c0_25], %34 {strides = array<i32>} : memref<1x8x1xf32, #tpu.memory_space<vmem>>, vector<1x8x1xf32>,
      %cst_26 = arith.constant 0.000000e+00 : f32
      %35 = vector.broadcast %cst_26 : f32 to vector<8x8xf32>
      %c0_27 = arith.constant 0 : index
      %c0_28 = arith.constant 0 : index
      %c0_29 = arith.constant 0 : index
      %36 = vector.load %arg4[%c0_27, %c0_28, %c0_29] : memref<1x8x8xf32, #tpu.memory_space<vmem>>, vector<1x8x8xf32>
      %37 = vector.shape_cast %36 : vector<1x8x8xf32> to vector<8x8xf32>
      %38 = vector.shape_cast %35 : vector<8x8xf32> to vector<1x8x8xf32>
      tpu.vector_store %arg4[%c0_27, %c0_28, %c0_29], %38 {strides = array<i32>} : memref<1x8x8xf32, #tpu.memory_space<vmem>>, vector<1x8x8xf32>,
    } else {
    }
    %cst = arith.constant 0.000000e+00 : f32
    %3 = vector.broadcast %cst : f32 to vector<8x1xf32>
    %cst_1 = arith.constant 0.000000e+00 : f32
    %4 = vector.broadcast %cst_1 : f32 to vector<8x8xf32>
    %c0 = arith.constant 0 : index
    %c0_2 = arith.constant 0 : index
    %c0_3 = arith.constant 0 : index
    %5 = vector.load %arg2[%c0, %c0_2, %c0_3] : memref<2x8x256xf32, #tpu.memory_space<vmem>>, vector<1x8x256xf32>
    %6 = vector.shape_cast %5 : vector<1x8x256xf32> to vector<8x256xf32>
    %cst_4 = arith.constant dense<0.000000e+00> : vector<8xf32>
    %7 = vector.multi_reduction <add>, %6, %cst_4 [1] : vector<8x256xf32> to vector<8xf32>
    %8 = vector.shape_cast %7 : vector<8xf32> to vector<8x1xf32>
    %9 = arith.addf %3, %8 : vector<8x1xf32>
    %cst_5 = arith.constant dense<0.000000e+00> : vector<8x8xf32>
    %10 = tpu.matmul %6, %6, %cst_5 {dimension_numbers = #tpu.dot_dimension_numbers<[1], [1], [0], [0], [0, 0, 1, 0], [], []>} : vector<8x256xf32>, vector<8x256xf32>, vector<8x8xf32> -> vector<8x8xf32>
    %11 = arith.addf %4, %10 : vector<8x8xf32>
    %c1 = arith.constant 1 : index
    %c0_6 = arith.constant 0 : index
    %c0_7 = arith.constant 0 : index
    %12 = vector.load %arg2[%c1, %c0_6, %c0_7] : memref<2x8x256xf32, #tpu.memory_space<vmem>>, vector<1x8x256xf32>
    %13 = vector.shape_cast %12 : vector<1x8x256xf32> to vector<8x256xf32>
    %cst_8 = arith.constant dense<0.000000e+00> : vector<8xf32>
    %14 = vector.multi_reduction <add>, %13, %cst_8 [1] : vector<8x256xf32> to vector<8xf32>
    %15 = vector.shape_cast %14 : vector<8xf32> to vector<8x1xf32>
    %16 = arith.addf %9, %15 : vector<8x1xf32>
    %cst_9 = arith.constant dense<0.000000e+00> : vector<8x8xf32>
    %17 = tpu.matmul %13, %13, %cst_9 {dimension_numbers = #tpu.dot_dimension_numbers<[1], [1], [0], [0], [0, 0, 1, 0], [], []>} : vector<8x256xf32>, vector<8x256xf32>, vector<8x8xf32> -> vector<8x8xf32>
    %18 = arith.addf %11, %17 : vector<8x8xf32>
    %c0_10 = arith.constant 0 : index
    %c0_11 = arith.constant 0 : index
    %c0_12 = arith.constant 0 : index
    %19 = vector.load %arg3[%c0_10, %c0_11, %c0_12] : memref<1x8x1xf32, #tpu.memory_space<vmem>>, vector<1x8x1xf32>
    %20 = vector.shape_cast %19 : vector<1x8x1xf32> to vector<8x1xf32>
    %21 = arith.addf %20, %16 : vector<8x1xf32>
    %c0_13 = arith.constant 0 : index
    %c0_14 = arith.constant 0 : index
    %c0_15 = arith.constant 0 : index
    %22 = vector.load %arg3[%c0_13, %c0_14, %c0_15] : memref<1x8x1xf32, #tpu.memory_space<vmem>>, vector<1x8x1xf32>
    %23 = vector.shape_cast %22 : vector<1x8x1xf32> to vector<8x1xf32>
    %24 = vector.shape_cast %21 : vector<8x1xf32> to vector<1x8x1xf32>
    tpu.vector_store %arg3[%c0_13, %c0_14, %c0_15], %24 {strides = array<i32>} : memref<1x8x1xf32, #tpu.memory_space<vmem>>, vector<1x8x1xf32>,
    %c0_16 = arith.constant 0 : index
    %c0_17 = arith.constant 0 : index
    %c0_18 = arith.constant 0 : index
    %25 = vector.load %arg4[%c0_16, %c0_17, %c0_18] : memref<1x8x8xf32, #tpu.memory_space<vmem>>, vector<1x8x8xf32>
    %26 = vector.shape_cast %25 : vector<1x8x8xf32> to vector<8x8xf32>
    %27 = arith.addf %26, %18 : vector<8x8xf32>
    %c0_19 = arith.constant 0 : index
    %c0_20 = arith.constant 0 : index
    %c0_21 = arith.constant 0 : index
    %28 = vector.load %arg4[%c0_19, %c0_20, %c0_21] : memref<1x8x8xf32, #tpu.memory_space<vmem>>, vector<1x8x8xf32>
    %29 = vector.shape_cast %28 : vector<1x8x8xf32> to vector<8x8xf32>
    %30 = vector.shape_cast %27 : vector<8x8xf32> to vector<1x8x8xf32>
    tpu.vector_store %arg4[%c0_19, %c0_20, %c0_21], %30 {strides = array<i32>} : memref<1x8x8xf32, #tpu.memory_space<vmem>>, vector<1x8x8xf32>,
    return
  }
  func.func @transform_0(%arg0: i32, %arg1: i32) -> (i32, i32, i32) {
    %c0_i32 = arith.constant 0 : i32
    %c0_i32_0 = arith.constant 0 : i32
    return %arg0, %c0_i32, %arg1 : i32, i32, i32
  }
  func.func @transform_1(%arg0: i32, %arg1: i32) -> (i32, i32, i32) {
    %c0_i32 = arith.constant 0 : i32
    %c0_i32_0 = arith.constant 0 : i32
    %c0_i32_1 = arith.constant 0 : i32
    return %arg0, %c0_i32, %c0_i32_0 : i32, i32, i32
  }
  func.func @transform_2(%arg0: i32, %arg1: i32) -> (i32, i32, i32) {
    %c0_i32 = arith.constant 0 : i32
    %c0_i32_0 = arith.constant 0 : i32
    %c0_i32_1 = arith.constant 0 : i32
    return %arg0, %c0_i32, %c0_i32_0 : i32, i32, i32
  }
}

</mosaic_0001>

<llo_original>
// kernel: tpu_custom_call.1
$region0: #{tpu_custom_call.1}
  #allocation0 [shape = 'u32[]', space=smem, size = 0x4, offset = 0x4, fixed_abs, tag = 'smem constant byte address 0x4 - core index']
  #allocation1 [shape = 'u32[144,128]{1,0:T(1,128)}', space=vmem, size = 0x12000, scoped, tag = 'internal scratch']
  %s0 = inlined_call_operand.hbm [shape: f32[2,8,256], index: 0, kind: input, shape index: {}]
  %s1 = inlined_call_operand.vmem [shape: f32[1,8,1], index: 1, kind: output, shape index: {0}]
  %s2 = inlined_call_operand.hbm [shape: f32[1,8,8], index: 2, kind: output, shape index: {1}]
  %3 = xla_tuple %s1, %s2
  %s4 = sld [smem:[#allocation0]]
  $region30: #{tpu_custom_call.1} parent=0
    _
  %s6 = ssub.s32 1, %s4
  %s7 = scalar_select 0, %s6, %s4
  $region1: #{tpu_custom_call.1} parent=0
    #allocation2 [shape = 'u8[16384]{0}', space=vmem, size = 0x4000, scoped, tag = 'input window, operand 0, single buffered']
    #allocation3 [shape = 's32[1]{0}', space=sflag, size = 0x4, scoped, tag = 'scoped memory for tpu_custom_call.1']
    #allocation4 [shape = 's32[1]{0}', space=sflag, size = 0x4, scoped, tag = 'scoped memory for tpu_custom_call.1']
    #allocation5 [shape = 'u8[4096]{0}', space=vmem, size = 0x1000, scoped, tag = 'output window, operand 1, single buffered']
    %8 = vsyncpa [#allocation3], 0
    %9 = vsyncpa [#allocation4], 0
    // Predicated region
    $region2: #{tpu_custom_call.1} parent=1 // pred_check
      _
    $region3: #{tpu_custom_call.1} parent=1 // pred_check_branch
      %11 = sbr.rel (0) target = $region5
    $region4: #{tpu_custom_call.1} parent=1 // pred_region
      %s13 = ssub.s32 512, 512
      %14 = vsyncadd [#allocation3], %s13
      %s15 = sshll.u32 [#allocation2], 4
      %s16 = int_to_ptr.vmem [resolvable:$true] %s15
      %21 = dma.hbm_to_vmem [thread:$0]  %s0, 512, %s16, [#allocation3], 256, 256, 16
    $region5: #{tpu_custom_call.1} parent=1 // pred_fallthru
      _
    // Predicated region
    $region6: #{tpu_custom_call.1} parent=1 // pred_check
      _
    $region7: #{tpu_custom_call.1} parent=1 // pred_check_branch
      %23 = sbr.rel (0) target = $region9
    $region8: #{tpu_custom_call.1} parent=1 // pred_region
      %24 = dma.done [#allocation3], 512
    $region9: #{tpu_custom_call.1} parent=1 // pred_fallthru
      _
    %p25 = scmp.eq.s32.totalorder 0, 0
    // Predicated region
    $region10: #{tpu_custom_call.1} parent=1 // pred_check
      %p26 = pneg %p25
    $region11: #{tpu_custom_call.1} parent=1 // pred_check_branch
      %28 = sbr.rel (%p26) target = $region13
    $region12: #{tpu_custom_call.1} parent=1 // pred_region
      %vm29 = vcmask 7168
      %30 = vst.msk [vmem:[%s1] sm:$0xff] %vm29, 0.0
      %vm31 = vcmask 64512
      %32 = vst.msk [vmem:[#allocation5] sm:$0xff] %vm31, 0.0
    $region13: #{tpu_custom_call.1} parent=1 // pred_fallthru
      _
    %v33 = vld [vmem:[#allocation2] sm:$0xff]
    %v34 = vld [vmem:[#allocation2 + $0x8] sm:$0xff]
    %v35 = vadd.f32 %v33, %v34
    %36 = vadd.xlane.f32.xlu0 %v35
    %v37 = vpop.xlane.xlu0 %36
    %v38 = vadd.f32 %v37, 0.0
    %s39 = scalar_lea.vmem [#allocation2], 16
    %v40 = vld [vmem:[%s39] sm:$0xff]
    %v41 = vld [vmem:[%s39 + $0x8] sm:$0xff]
    %v42 = vadd.f32 %v40, %v41
    %43 = vadd.xlane.f32.xlu0 %v42
    %v44 = vpop.xlane.xlu0 %43
    %v45 = vadd.f32 %v38, %v44
    %46 = vmatprep.subr.mxu0 %v41
    %47 = vmatpush1.xpose.msra.mxu0 %v40
    %48 = vmatprep.subr.mxu0 0.0
    %49 = vmatpush1.xpose.msra.mxu0 0.0
    %50 = vmatprep.subr.mxu0 0.0
    %51 = vmatpush1.xpose.msra.mxu0 0.0
    %52 = vmatprep.subr.mxu0 0.0
    %53 = vmatpush1.xpose.msra.mxu0 0.0
    %54 = vmatprep.subr.mxu0 0.0
    %55 = vmatpush1.xpose.msra.mxu0 0.0
    %56 = vmatprep.subr.mxu0 0.0
    %57 = vmatpush1.xpose.msra.mxu0 0.0
    %58 = vmatprep.subr.mxu0 0.0
    %59 = vmatpush1.xpose.msra.mxu0 0.0
    %60 = vmatprep.subr.mxu0 0.0
    %61 = vmatpush1.xpose.msra.mxu0 0.0
    %62 = vmatprep.subr.mxu0 0.0
    %63 = vmatpush1.xpose.msra.mxu0 0.0
    %64 = vmatprep.subr.mxu0 0.0
    %65 = vmatpush1.xpose.msra.mxu0 0.0
    %66 = vmatprep.subr.mxu0 0.0
    %67 = vmatpush1.xpose.msra.mxu0 0.0
    %68 = vmatprep.subr.mxu0 0.0
    %69 = vmatpush1.xpose.msra.mxu0 0.0
    %70 = vmatprep.subr.mxu0 0.0
    %71 = vmatpush1.xpose.msra.mxu0 0.0
    %72 = vmatprep.subr.mxu0 0.0
    %73 = vmatpush1.xpose.msra.mxu0 0.0
    %74 = vmatprep.subr.mxu0 0.0
    %75 = vmatpush1.xpose.msra.mxu0 0.0
    %76 = vmatprep.subr.mxu0 0.0
    %77 = vmatpush1.xpose.msra.mxu0 0.0
    %78 = vmatprep.subr.mxu0 0.0
    %79 = vmatpush1.xpose.msra.mxu0 0.0
    %80 = vmatprep.subr.mxu0 0.0
    %81 = vmatpush1.xpose.msra.mxu0 0.0
    %82 = vmatprep.subr.mxu0 0.0
    %83 = vmatpush1.xpose.msra.mxu0 0.0
    %84 = vmatprep.subr.mxu0 0.0
    %85 = vmatpush1.xpose.msra.mxu0 0.0
    %86 = vmatprep.subr.mxu0 0.0
    %87 = vmatpush1.xpose.msra.mxu0 0.0
    %88 = vmatprep.subr.mxu0 0.0
    %89 = vmatpush1.xpose.msra.mxu0 0.0
    %90 = vmatprep.subr.mxu0 0.0
    %91 = vmatpush1.xpose.msra.mxu0 0.0
    %92 = vmatprep.subr.mxu0 0.0
    %93 = vmatpush1.xpose.msra.mxu0 0.0
    %94 = vmatprep.subr.mxu0 0.0
    %95 = vmatpush1.xpose.msra.mxu0 0.0
    %96 = vmatprep.subr.mxu0 0.0
    %97 = vmatpush1.xpose.msra.mxu0 0.0
    %98 = vmatprep.subr.mxu0 0.0
    %99 = vmatpush1.xpose.msra.mxu0 0.0
    %100 = vmatprep.subr.mxu0 0.0
    %101 = vmatpush1.xpose.msra.mxu0 0.0
    %102 = vmatprep.subr.mxu0 0.0
    %103 = vmatpush1.xpose.msra.mxu0 0.0
    %104 = vmatprep.subr.mxu0 0.0
    %105 = vmatpush1.xpose.msra.mxu0 0.0
    %106 = vmatprep.subr.mxu0 0.0
    %107 = vmatpush1.xpose.msra.mxu0 0.0
    %108 = vmatprep.subr.mxu0 0.0
    %109 = vmatpush1.xpose.msra.mxu0 0.0
    %110 = vmatprep.mubr.f32.mxu0 %v41
    %111 = vmatmul.mubr.f32.gmra.mrb[0].mxu0 %v40
    %v112 = vpop.f32.mrb[0].mxu0
    %v113 = vadd.f32 0.0, %v112
    %v114 = vpop.f32.mrb[0].mxu0
    %115 = vdwg.mxu0
    %116 = vmatprep.subr.mxu0 %v34
    %117 = vmatpush1.xpose.msra.mxu0 %v33
    %118 = vmatprep.subr.mxu0 0.0
    %119 = vmatpush1.xpose.msra.mxu0 0.0
    %120 = vmatprep.subr.mxu0 0.0
    %121 = vmatpush1.xpose.msra.mxu0 0.0
    %122 = vmatprep.subr.mxu0 0.0
    %123 = vmatpush1.xpose.msra.mxu0 0.0
    %124 = vmatprep.subr.mxu0 0.0
    %125 = vmatpush1.xpose.msra.mxu0 0.0
    %126 = vmatprep.subr.mxu0 0.0
    %127 = vmatpush1.xpose.msra.mxu0 0.0
    %128 = vmatprep.subr.mxu0 0.0
    %129 = vmatpush1.xpose.msra.mxu0 0.0
    %130 = vmatprep.subr.mxu0 0.0
    %131 = vmatpush1.xpose.msra.mxu0 0.0
    %132 = vmatprep.subr.mxu0 0.0
    %133 = vmatpush1.xpose.msra.mxu0 0.0
    %134 = vmatprep.subr.mxu0 0.0
    %135 = vmatpush1.xpose.msra.mxu0 0.0
    %136 = vmatprep.subr.mxu0 0.0
    %137 = vmatpush1.xpose.msra.mxu0 0.0
    %138 = vmatprep.subr.mxu0 0.0
    %139 = vmatpush1.xpose.msra.mxu0 0.0
    %140 = vmatprep.subr.mxu0 0.0
    %141 = vmatpush1.xpose.msra.mxu0 0.0
    %142 = vmatprep.subr.mxu0 0.0
    %143 = vmatpush1.xpose.msra.mxu0 0.0
    %144 = vmatprep.subr.mxu0 0.0
    %145 = vmatpush1.xpose.msra.mxu0 0.0
    %146 = vmatprep.subr.mxu0 0.0
    %147 = vmatpush1.xpose.msra.mxu0 0.0
    %148 = vmatprep.subr.mxu0 0.0
    %149 = vmatpush1.xpose.msra.mxu0 0.0
    %150 = vmatprep.subr.mxu0 0.0
    %151 = vmatpush1.xpose.msra.mxu0 0.0
    %152 = vmatprep.subr.mxu0 0.0
    %153 = vmatpush1.xpose.msra.mxu0 0.0
    %154 = vmatprep.subr.mxu0 0.0
    %155 = vmatpush1.xpose.msra.mxu0 0.0
    %156 = vmatprep.subr.mxu0 0.0
    %157 = vmatpush1.xpose.msra.mxu0 0.0
    %158 = vmatprep.subr.mxu0 0.0
    %159 = vmatpush1.xpose.msra.mxu0 0.0
    %160 = vmatprep.subr.mxu0 0.0
    %161 = vmatpush1.xpose.msra.mxu0 0.0
    %162 = vmatprep.subr.mxu0 0.0
    %163 = vmatpush1.xpose.msra.mxu0 0.0
    %164 = vmatprep.subr.mxu0 0.0
    %165 = vmatpush1.xpose.msra.mxu0 0.0
    %166 = vmatprep.subr.mxu0 0.0
    %167 = vmatpush1.xpose.msra.mxu0 0.0
    %168 = vmatprep.subr.mxu0 0.0
    %169 = vmatpush1.xpose.msra.mxu0 0.0
    %170 = vmatprep.subr.mxu0 0.0
    %171 = vmatpush1.xpose.msra.mxu0 0.0
    %172 = vmatprep.subr.mxu0 0.0
    %173 = vmatpush1.xpose.msra.mxu0 0.0
    %174 = vmatprep.subr.mxu0 0.0
    %175 = vmatpush1.xpose.msra.mxu0 0.0
    %176 = vmatprep.subr.mxu0 0.0
    %177 = vmatpush1.xpose.msra.mxu0 0.0
    %178 = vmatprep.subr.mxu0 0.0
    %179 = vmatpush1.xpose.msra.mxu0 0.0
    %180 = vmatprep.mubr.f32.mxu0 %v34
    %181 = vmatmul.mubr.f32.gmra.mrb[0].mxu0 %v33
    %v182 = vpop.f32.mrb[0].mxu0
    %v183 = vadd.f32 %v113, %v182
    %v184 = vpop.f32.mrb[0].mxu0
    %185 = vdwg.mxu0
    %v186 = vld [vmem:[%s1] sm:$0xff]
    %v187 = vadd.f32 %v186, %v45
    %vm188 = vcmask 7168
    %189 = vst.msk [vmem:[%s1] sm:$0xff] %vm188, %v187
    %v190 = vld [vmem:[#allocation5] sm:$0xff]
    %v191 = vadd.f32 %v190, %v183
    %vm192 = vcmask 64512
    %193 = vst.msk [vmem:[#allocation5] sm:$0xff] %vm192, %v191
    // Predicated region
    $region14: #{tpu_custom_call.1} parent=1 // pred_check
      _
    $region15: #{tpu_custom_call.1} parent=1 // pred_check_branch
      %195 = sbr.rel (0) target = $region17
    $region16: #{tpu_custom_call.1} parent=1 // pred_region
      _
    $region17: #{tpu_custom_call.1} parent=1 // pred_fallthru
      _
    // Predicated region
    $region18: #{tpu_custom_call.1} parent=1 // pred_check
      _
    $region19: #{tpu_custom_call.1} parent=1 // pred_check_branch
      %197 = sbr.rel (0) target = $region21
    $region20: #{tpu_custom_call.1} parent=1 // pred_region
      %s199 = ssub.s32 128, 128
      %200 = vsyncadd [#allocation4], %s199
      %s202 = sshll.u32 [#allocation5], 4
      %s203 = int_to_ptr.vmem [resolvable:$true] %s202
      %205 = dma.vmem_to_hbm [thread:$0]  %s203, 128, %s2, [#allocation4]
    $region21: #{tpu_custom_call.1} parent=1 // pred_fallthru
      _
    // Predicated region
    $region22: #{tpu_custom_call.1} parent=1 // pred_check
      _
    $region23: #{tpu_custom_call.1} parent=1 // pred_check_branch
      %207 = sbr.rel (0) target = $region25
    $region24: #{tpu_custom_call.1} parent=1 // pred_region
      _
    $region25: #{tpu_custom_call.1} parent=1 // pred_fallthru
      _
    // Predicated region
    $region26: #{tpu_custom_call.1} parent=1 // pred_check
      _
    $region27: #{tpu_custom_call.1} parent=1 // pred_check_branch
      %209 = sbr.rel (0) target = $region29
    $region28: #{tpu_custom_call.1} parent=1 // pred_region
      %210 = dma.done [#allocation4], 128
    $region29: #{tpu_custom_call.1} parent=1 // pred_fallthru
      _
    %211 = vsyncpa [#allocation3], 1
    %212 = vsyncpa [#allocation4], 1

</llo_original>
